<compile_context>
chip_gen: v5e
topology: v5e:2x2
jax: 0.10.0
libtpu: 0.0.40
codegen_flags: <defaults>
</compile_context>

<pallas_src>
import functools
import math

import jax
import jax.numpy as jnp
from jax.experimental import pallas as pl
from jax.experimental.pallas import tpu as pltpu

# Conservative scoped-VMEM cap that is safe on v7x (64 MiB physical/TC) while
# still leaving room for large tiles on v5e/v6e (128 MiB physical).
_VMEM_LIMIT = 48 * 1024 * 1024


def _round_up(x, m):
    return (x + m - 1) // m * m


def _pick_m_tile(M):
    """M tile for the 1x1-conv GEMM: biggest tile that still gives >=2 grid
    steps (so both TensorCores get work on v7x / megacore)."""
    for t in (512, 256, 128, 64, 32, 16):
        if M >= 2 * t:
            return t
    return 16


# --------------------------------------------------------------------------
# 1x1 conv as a GEMM with VMEM-resident weights (bias / residual / ReLU fused)
# --------------------------------------------------------------------------
def _gemm_kernel(x_ref, w_ref, b_ref, o_ref, *, relu):
    out = jnp.dot(x_ref[...], w_ref[...], preferred_element_type=jnp.float32)
    out = out + b_ref[...]
    if relu:
        out = jnp.maximum(out, 0.0)
    o_ref[...] = out.astype(o_ref.dtype)


def _gemm_res_kernel(x_ref, w_ref, b_ref, r_ref, o_ref, *, relu):
    out = jnp.dot(x_ref[...], w_ref[...], preferred_element_type=jnp.float32)
    out = out + b_ref[...] + r_ref[...].astype(jnp.float32)
    if relu:
        out = jnp.maximum(out, 0.0)
    o_ref[...] = out.astype(o_ref.dtype)


def pallas_gemm(x, w, b, *, relu=False, residual=None, out_dtype=jnp.bfloat16):
    """out = [relu](x @ w + b [+ residual]).

    The entire (K, N) weight stays VMEM-resident (all res5 weights are a few
    MiB in bf16), so the grid only iterates over M and there is no K
    reduction axis, no f32 accumulator scratch and no weight re-fetch.
    """
    M, K = x.shape
    _, N = w.shape
    Kp = _round_up(K, 128)
    Np = _round_up(N, 128)
    tm = _pick_m_tile(M)
    Mp = _round_up(M, tm)

    x = x.astype(jnp.bfloat16)
    w = w.astype(jnp.bfloat16)
    if (Mp, Kp) != (M, K):
        x = jnp.pad(x, ((0, Mp - M), (0, Kp - K)))
    if (Kp, Np) != (K, N):
        w = jnp.pad(w, ((0, Kp - K), (0, Np - N)))
    b2 = b.astype(jnp.float32).reshape(1, N)
    if Np != N:
        b2 = jnp.pad(b2, ((0, 0), (0, Np - N)))

    in_specs = [pl.BlockSpec((tm, Kp), lambda i: (i, 0)),
                pl.BlockSpec((Kp, Np), lambda i: (0, 0)),
                pl.BlockSpec((1, Np), lambda i: (0, 0))]
    args = [x, w, b2]
    if residual is None:
        kernel = functools.partial(_gemm_kernel, relu=relu)
    else:
        r = residual.astype(jnp.bfloat16)
        if (Mp, Np) != (M, N):
            r = jnp.pad(r, ((0, Mp - M), (0, Np - N)))
        in_specs.append(pl.BlockSpec((tm, Np), lambda i: (i, 0)))
        args.append(r)
        kernel = functools.partial(_gemm_res_kernel, relu=relu)

    out = pl.pallas_call(
        kernel,
        grid=(Mp // tm,),
        in_specs=in_specs,
        out_specs=pl.BlockSpec((tm, Np), lambda i: (i, 0)),
        out_shape=jax.ShapeDtypeStruct((Mp, Np), out_dtype),
        compiler_params=pltpu.CompilerParams(
            dimension_semantics=("parallel",),
            vmem_limit_bytes=_VMEM_LIMIT),
        cost_estimate=pl.CostEstimate(
            flops=2 * Mp * Np * Kp, transcendentals=0,
            bytes_accessed=2 * (Mp * Kp + Kp * Np + Mp * Np) + 4 * Np),
    )(*args)
    if (Mp, Np) != (M, N):
        out = out[:M, :N]
    return out


# --------------------------------------------------------------------------
# 3x3 conv: 9 taps accumulated in an f32 VMEM scratch, whole H slab per step
# --------------------------------------------------------------------------
def _conv3x3_kernel(x_ref, w_ref, b_ref, o_ref, acc_ref, *, H, W, L, relu):
    # x_ref: (H, L, Cin) with L = rt*W for a tile of rt ROIs.
    Cin = x_ref.shape[-1]
    M = H * L
    xf = x_ref[...].reshape(M, Cin)

    pos = jax.lax.broadcasted_iota(jnp.int32, (M, 1), 0)
    y = pos // L
    xcol = pos % W
    # Boundary predicates, hoisted once (only 4 distinct ones are ever used).
    ymask = {-1: y >= 1, 0: None, 1: y <= H - 2}
    xmask = {-1: xcol >= 1, 0: None, 1: xcol <= W - 2}

    acc_ref[...] = jnp.zeros_like(acc_ref)
    for ky in range(3):
        dy = ky - 1
        for kx in range(3):
            dx = kx - 1
            delta = dy * L + dx
            shift = (-delta) % M        # python int, always non-negative
            src = pltpu.roll(xf, shift=shift, axis=0) if shift else xf
            masks = [m for m in (ymask[dy], xmask[dx]) if m is not None]
            if masks:
                valid = masks[0] if len(masks) == 1 else (masks[0] & masks[1])
                src = jnp.where(valid, src, jnp.zeros_like(src))
            acc_ref[...] += jnp.dot(src, w_ref[3 * ky + kx],
                                    preferred_element_type=jnp.float32)
    out = acc_ref[...] + b_ref[...]
    if relu:
        out = jnp.maximum(out, 0.0)
    o_ref[...] = out.reshape(o_ref.shape).astype(o_ref.dtype)


def _conv_roi_tile(R, H, W, Cin, Cout):
    """Largest ROI tile that fits the VMEM budget, preferring >=2 grid steps."""
    budget = int(_VMEM_LIMIT * 0.9)
    best = None
    for t in (64, 32, 16, 8, 4, 2, 1):
        if R % t:
            continue
        L = t * W
        need = (2 * 2 * H * L * Cin        # double-buffered bf16 input slab
                + 4 * H * L * Cout         # f32 accumulator scratch
                + 2 * 2 * H * L * Cout     # double-buffered bf16 output slab
                + 2 * 2 * 9 * Cin * Cout)  # weights
        if need <= budget:
            if best is None:
                best = t
            if R // t >= 2:
                return t
    return best or 1


def conv3x3(x, w, b, *, relu=True):
    """3x3 'same' conv, stride 1, on H-major activations (H, R, W, Cin)."""
    H, R, W, Cin = x.shape
    Cout = w.shape[-1]
    rt = _conv_roi_tile(R, H, W, Cin, Cout)
    L = rt * W
    x3 = x.reshape(H, R * W, Cin)          # no HBM padding pass
    w9 = w.reshape(9, Cin, Cout).astype(jnp.bfloat16)
    b2 = b.astype(jnp.float32).reshape(1, Cout)

    out = pl.pallas_call(
        functools.partial(_conv3x3_kernel, H=H, W=W, L=L, relu=relu),
        grid=(R // rt,),
        in_specs=[pl.BlockSpec((H, L, Cin), lambda i: (0, i, 0)),
                  pl.BlockSpec((9, Cin, Cout), lambda i: (0, 0, 0)),
                  pl.BlockSpec((1, Cout), lambda i: (0, 0))],
        out_specs=pl.BlockSpec((H, L, Cout), lambda i: (0, i, 0)),
        out_shape=jax.ShapeDtypeStruct((H, R * W, Cout), jnp.bfloat16),
        scratch_shapes=[pltpu.VMEM((H * L, Cout), jnp.float32)],
        compiler_params=pltpu.CompilerParams(
            dimension_semantics=("parallel",),
            vmem_limit_bytes=_VMEM_LIMIT),
        cost_estimate=pl.CostEstimate(
            flops=2 * 9 * H * R * W * Cin * Cout, transcendentals=0,
            bytes_accessed=2 * (H * R * W * Cin + H * R * W * Cout
                                + 9 * Cin * Cout * (R // rt))),
    )(x3, w9, b2)
    return out.reshape(H, R, W, Cout)


# --------------------------------------------------------------------------
# Fused mean-pool + FastRCNNOutputLayers head
# (H is an 'arbitrary' reduction axis accumulating into an (rt, C) scratch;
#  the lane-dense head GEMM runs once at the last H step)
# --------------------------------------------------------------------------
def _head_kernel(x_ref, w_ref, b_ref, o_ref, acc_ref, *, inv_hw):
    h = pl.program_id(1)

    @pl.when(h == 0)
    def _init():
        acc_ref[...] = jnp.zeros_like(acc_ref)

    # x_ref: (rt, W, C) — one H slice of the ROI tile; sum W in f32.
    acc_ref[...] += jnp.sum(x_ref[...].astype(jnp.float32), axis=1)

    @pl.when(h == pl.num_programs(1) - 1)
    def _fini():
        pooled = (acc_ref[...] * inv_hw).astype(jnp.bfloat16)
        o_ref[...] = (jnp.dot(pooled, w_ref[...],
                              preferred_element_type=jnp.float32) + b_ref[...])


def pallas_box_head(box_features, w_head, b_head, ncls, nbox):
    H, R, W, C = box_features.shape
    Nh = w_head.shape[1]
    rt = next((t for t in (64, 32, 16, 8) if R % t == 0 and R // t >= 2),
              next((t for t in (64, 32, 16, 8) if R % t == 0), R))
    out = pl.pallas_call(
        functools.partial(_head_kernel, inv_hw=1.0 / (H * W)),
        grid=(R // rt, H),
        in_specs=[pl.BlockSpec((None, rt, W, C), lambda i, h: (h, i, 0, 0)),
                  pl.BlockSpec((C, Nh), lambda i, h: (0, 0)),
                  pl.BlockSpec((1, Nh), lambda i, h: (0, 0))],
        out_specs=pl.BlockSpec((rt, Nh), lambda i, h: (i, 0)),
        out_shape=jax.ShapeDtypeStruct((R, Nh), jnp.float32),
        scratch_shapes=[pltpu.VMEM((rt, C), jnp.float32)],
        compiler_params=pltpu.CompilerParams(
            dimension_semantics=("parallel", "arbitrary"),
            vmem_limit_bytes=_VMEM_LIMIT),
    )(box_features, w_head, b_head)
    # TODO(synk): the pooled sums could be accumulated directly in the last
    # bottleneck's conv3 epilogue to avoid re-reading box_features at all.
    return out[:, :ncls], out[:, ncls:ncls + nbox]


# --------------------------------------------------------------------------
# res5 stage glue (all heavy math goes through the Pallas kernels above)
# --------------------------------------------------------------------------
def conv1x1(x, w, b, *, relu=True, residual=None):
    # x: (H, R, W, Cin) H-major ; w: (Cin, Cout)
    H, R, W, Cin = x.shape
    Cout = w.shape[1]
    r2 = None if residual is None else residual.reshape(H * R * W, Cout)
    out = pallas_gemm(x.reshape(H * R * W, Cin), w, b, relu=relu, residual=r2)
    return out.reshape(H, R, W, Cout)


def bottleneck_block(x, p, *, stride):
    """detectron2 BottleneckBlock (stride_in_1x1, FrozenBN folded into w/b)."""
    if stride > 1:
        # Subsample once and share between the main path and the shortcut
        # (equivalent to a stride-s 1x1 conv on both).
        x = x[::stride, :, ::stride, :]
    out = conv1x1(x, p["w1"], p["b1"], relu=True)
    out = conv3x3(out, p["w2"], p["b2"], relu=True)
    if "w_sc" in p:
        shortcut = conv1x1(x, p["w_sc"], p["b_sc"], relu=False)
    else:
        shortcut = x
    # conv3 + bias + shortcut + ReLU fused in one GEMM epilogue.
    return conv1x1(out, p["w3"], p["b3"], relu=True, residual=shortcut)


# --------------------------------------------------------------------------
# ROIAlign (ROIAlignV2 / aligned=True), plain JAX glue (bf16 source, emits
# the H-major (P, R, P, C) bf16 layout the res5 stage consumes)
# --------------------------------------------------------------------------
def roi_align(features, boxes, batch_idx, output_size, spatial_scale,
              sampling_ratio, aligned=True):
    # TODO(synk): the per-ROI bilinear gather is data-dependent and kept in
    # plain JAX; a Pallas version needs PrefetchScalarGridSpec + manual DMA.
    N, H, W, C = features.shape
    features = features.astype(jnp.bfloat16)
    P = output_size
    ns = sampling_ratio
    offset = 0.5 if aligned else 0.0
    bx = boxes * spatial_scale
    x0, y0 = bx[:, 0] - offset, bx[:, 1] - offset
    x1, y1 = bx[:, 2] - offset, bx[:, 3] - offset
    roi_w, roi_h = x1 - x0, y1 - y0
    if not aligned:
        roi_w = jnp.maximum(roi_w, 1.0)
        roi_h = jnp.maximum(roi_h, 1.0)
    bin_w, bin_h = roi_w / P, roi_h / P
    grid = (jnp.arange(P)[:, None] + (jnp.arange(ns)[None, :] + 0.5) / ns).reshape(-1)
    ys = y0[:, None] + grid[None, :] * bin_h[:, None]      # (R, P*ns)
    xs = x0[:, None] + grid[None, :] * bin_w[:, None]      # (R, P*ns)

    def sample_one(img, ys_r, xs_r):                       # img: (H, W, C) bf16
        valid_y = (ys_r >= -1.0) & (ys_r <= H)
        valid_x = (xs_r >= -1.0) & (xs_r <= W)
        y = jnp.clip(ys_r, 0.0, H - 1)
        x = jnp.clip(xs_r, 0.0, W - 1)
        ylo = jnp.floor(y).astype(jnp.int32)
        xlo = jnp.floor(x).astype(jnp.int32)
        yhi = jnp.minimum(ylo + 1, H - 1)
        xhi = jnp.minimum(xlo + 1, W - 1)
        ly, lx = y - ylo, x - xlo
        hy, hx = 1.0 - ly, 1.0 - lx
        rows_lo, rows_hi = img[ylo], img[yhi]              # (S, W, C)
        v00, v01 = rows_lo[:, xlo], rows_lo[:, xhi]        # (S, S, C)
        v10, v11 = rows_hi[:, xlo], rows_hi[:, xhi]
        val = (hy[:, None, None] * hx[None, :, None] * v00
               + hy[:, None, None] * lx[None, :, None] * v01
               + ly[:, None, None] * hx[None, :, None] * v10
               + ly[:, None, None] * lx[None, :, None] * v11)
        mask = (valid_y[:, None] & valid_x[None, :])[..., None]
        return jnp.where(mask, val, 0.0)

    samples = jax.vmap(sample_one)(features[batch_idx], ys, xs)  # (R, P*ns, P*ns, C)
    samples = samples.reshape(-1, P, ns, P, ns, C)
    pooled = samples.mean(axis=(2, 4))                           # (R, P, P, C)
    # Emit H-major bf16 directly (no separate transpose/astype pass).
    return jnp.transpose(pooled, (1, 0, 2, 3)).astype(jnp.bfloat16)


# --------------------------------------------------------------------------
# Res5ROIHeads forward (inference path; mask_on=False)
# --------------------------------------------------------------------------
def res5_roi_heads_forward(features, proposal_boxes, batch_idx, params, *,
                           pooler_resolution, pooler_scale, sampling_ratio):
    R = proposal_boxes.shape[0]
    R_pad = _round_up(R, 16)
    if R_pad != R:
        proposal_boxes = jnp.pad(proposal_boxes, ((0, R_pad - R), (0, 0)))
        batch_idx = jnp.pad(batch_idx, (0, R_pad - R))
    # pooler (_shared_roi_transform, step 1) -> H-major (P, R, P, C) bf16
    x = roi_align(features, proposal_boxes, batch_idx, pooler_resolution,
                  pooler_scale, sampling_ratio, aligned=True)
    # res5 stage: 3 BottleneckBlocks, first_stride=2 (_shared_roi_transform)
    for i, p in enumerate(params["res5"]):
        x = bottleneck_block(x, p, stride=2 if i == 0 else 1)
    # feature_pooled = mean(dim=[2,3]); FastRCNNOutputLayers fused in one kernel.
    cls_logits, deltas = pallas_box_head(x, params["head_w"], params["head_b"],
                                         params["ncls"], params["nbox"])
    # TODO(synk): FastRCNNOutputs.inference (softmax + box decoding + NMS) and
    # the training-time label sampling / losses / mask head are data-dependent
    # host-side logic with no clean Pallas equivalent; raw head outputs returned.
    return cls_logits[:R], deltas[:R]


# --------------------------------------------------------------------------
# Deterministic synthetic parameters (FrozenBN folded into conv weight/bias)
# --------------------------------------------------------------------------
def init_params(key, in_channels, bottleneck_channels, out_channels,
                num_classes, cls_agnostic_bbox_reg=False):
    keys = iter(jax.random.split(key, 64))

    def conv_w(shape):
        fan_in = int(math.prod(shape[:-1]))
        w = jax.random.normal(next(keys), shape, jnp.float32) / math.sqrt(fan_in)
        return w.astype(jnp.bfloat16)

    def bias(n):
        return 0.01 * jax.random.normal(next(keys), (n,), jnp.float32)

    params = {"res5": []}
    c_in = in_channels
    for blk in range(3):
        p = {"w1": conv_w((c_in, bottleneck_channels)),
             "b1": bias(bottleneck_channels),
             "w2": conv_w((3, 3, bottleneck_channels, bottleneck_channels)),
             "b2": bias(bottleneck_channels),
             "w3": conv_w((bottleneck_channels, out_channels)),
             "b3": bias(out_channels)}
        if blk == 0:  # shortcut conv only on the first (strided) block
            p["w_sc"] = conv_w((c_in, out_channels))
            p["b_sc"] = bias(out_channels)
        params["res5"].append(p)
        c_in = out_channels

    ncls = num_classes + 1
    nbox = 4 if cls_agnostic_bbox_reg else 4 * num_classes
    cls_w = 0.01 * jax.random.normal(next(keys), (out_channels, ncls), jnp.float32)
    box_w = 0.001 * jax.random.normal(next(keys), (out_channels, nbox), jnp.float32)
    head_w = jnp.concatenate([cls_w, box_w], axis=1)
    head_b = jnp.zeros((ncls + nbox,), jnp.float32)
    nh_pad = _round_up(ncls + nbox, 128)          # lane-dense head output
    head_w = jnp.pad(head_w, ((0, 0), (0, nh_pad - (ncls + nbox))))
    head_b = jnp.pad(head_b, (0, nh_pad - (ncls + nbox)))
    params["head_w"] = head_w.astype(jnp.bfloat16)
    params["head_b"] = head_b.reshape(1, nh_pad)
    params["ncls"] = ncls
    params["nbox"] = nbox
    return params


if __name__ == "__main__":
    key = jax.random.PRNGKey(0)
    k_feat, k_box, k_param = jax.random.split(key, 3)

    # Small synthetic config (scaled-down C4 head)
    N, H, W = 2, 16, 16
    in_channels = 16            # = res5 out_channels // 2
    bottleneck_channels = 16
    out_channels = 32
    num_classes = 5
    pooler_resolution = 8
    feature_stride = 4          # pooler_scale = 1 / stride
    rois_per_image = 4
    R = N * rois_per_image

    features = jax.random.normal(k_feat, (N, H, W, in_channels), jnp.float32)

    img_size = float(H * feature_stride)
    kx0, ky0, kw, kh = jax.random.split(k_box, 4)
    bx0 = jax.random.uniform(kx0, (R,), minval=0.0, maxval=0.6 * img_size)
    by0 = jax.random.uniform(ky0, (R,), minval=0.0, maxval=0.6 * img_size)
    bw = jax.random.uniform(kw, (R,), minval=8.0, maxval=0.4 * img_size)
    bh = jax.random.uniform(kh, (R,), minval=8.0, maxval=0.4 * img_size)
    proposal_boxes = jnp.stack(
        [bx0, by0, jnp.minimum(bx0 + bw, img_size), jnp.minimum(by0 + bh, img_size)],
        axis=1)
    batch_idx = jnp.repeat(jnp.arange(N, dtype=jnp.int32), rois_per_image)

    params = init_params(k_param, in_channels, bottleneck_channels,
                         out_channels, num_classes)

    cls_logits, deltas = res5_roi_heads_forward(
        features, proposal_boxes, batch_idx, params,
        pooler_resolution=pooler_resolution,
        pooler_scale=1.0 / feature_stride,
        sampling_ratio=2)
    jax.block_until_ready((cls_logits, deltas))

    assert cls_logits.shape == (R, num_classes + 1)
    assert deltas.shape == (R, 4 * num_classes)
    assert bool(jnp.all(jnp.isfinite(cls_logits))) and bool(jnp.all(jnp.isfinite(deltas)))
    print("KERNEL_OK")
</pallas_src>

<mosaic_0001>
module attributes {stable_mosaic.version = 11 : i64} {
  func.func @_gemm_kernel(%arg0: i32, %arg1: memref<128x128xbf16, #tpu.memory_space<vmem>>, %arg2: memref<128x128xbf16, #tpu.memory_space<vmem>>, %arg3: memref<1x128xf32, #tpu.memory_space<vmem>>, %arg4: memref<128x128xbf16, #tpu.memory_space<vmem>>) attributes {dimension_semantics = [#tpu.dimension_semantics<parallel>], iteration_bounds = array<i64: 2>, scalar_prefetch = 0 : i64, scratch_operands = 0 : i64, tpu.core_type = #tpu.core_type<tc>, window_params = [{transform_indices = @transform_0, window_bounds = array<i64: 128, 128>}, {pipeline_mode = #tpu.pipeline_mode<synchronous>, transform_indices = @transform_1, window_bounds = array<i64: 128, 128>}, {pipeline_mode = #tpu.pipeline_mode<synchronous>, transform_indices = @transform_2, window_bounds = array<i64: 1, 128>}, {transform_indices = @transform_3, window_bounds = array<i64: 128, 128>}]} {
    %c0 = arith.constant 0 : index
    %c0_0 = arith.constant 0 : index
    %0 = vector.load %arg1[%c0, %c0_0] : memref<128x128xbf16, #tpu.memory_space<vmem>>, vector<128x128xbf16>
    %c0_1 = arith.constant 0 : index
    %c0_2 = arith.constant 0 : index
    %1 = vector.load %arg2[%c0_1, %c0_2] : memref<128x128xbf16, #tpu.memory_space<vmem>>, vector<128x128xbf16>
    %cst = arith.constant dense<0.000000e+00> : vector<128x128xf32>
    %2 = tpu.matmul %0, %1, %cst {dimension_numbers = #tpu.dot_dimension_numbers<[1], [0], [0], [1], [0, 0, 1, 1], [], []>} : vector<128x128xbf16>, vector<128x128xbf16>, vector<128x128xf32> -> vector<128x128xf32>
    %c0_3 = arith.constant 0 : index
    %c0_4 = arith.constant 0 : index
    %3 = vector.load %arg3[%c0_3, %c0_4] : memref<1x128xf32, #tpu.memory_space<vmem>>, vector<1x128xf32>
    %4 = vector.broadcast %3 : vector<1x128xf32> to vector<128x128xf32>
    %5 = arith.addf %2, %4 : vector<128x128xf32>
    %cst_5 = arith.constant 0.000000e+00 : f32
    %6 = vector.broadcast %cst_5 : f32 to vector<128x128xf32>
    %7 = arith.maximumf %5, %6 : vector<128x128xf32>
    %8 = arith.truncf %7 : vector<128x128xf32> to vector<128x128xbf16>
    %c0_6 = arith.constant 0 : index
    %c0_7 = arith.constant 0 : index
    %9 = vector.load %arg4[%c0_6, %c0_7] : memref<128x128xbf16, #tpu.memory_space<vmem>>, vector<128x128xbf16>
    tpu.vector_store %arg4[%c0_6, %c0_7], %8 {strides = array<i32>} : memref<128x128xbf16, #tpu.memory_space<vmem>>, vector<128x128xbf16>,
    return
  }
  func.func @transform_0(%arg0: i32) -> (i32, i32) {
    %c0_i32 = arith.constant 0 : i32
    %c0_i32_0 = arith.constant 0 : i32
    return %arg0, %c0_i32 : i32, i32
  }
  func.func @transform_1(%arg0: i32) -> (i32, i32) {
    %c0_i32 = arith.constant 0 : i32
    %c0_i32_0 = arith.constant 0 : i32
    %c0_i32_1 = arith.constant 0 : i32
    return %c0_i32, %c0_i32_0 : i32, i32
  }
  func.func @transform_2(%arg0: i32) -> (i32, i32) {
    %c0_i32 = arith.constant 0 : i32
    %c0_i32_0 = arith.constant 0 : i32
    %c0_i32_1 = arith.constant 0 : i32
    return %c0_i32, %c0_i32_0 : i32, i32
  }
  func.func @transform_3(%arg0: i32) -> (i32, i32) {
    %c0_i32 = arith.constant 0 : i32
    %c0_i32_0 = arith.constant 0 : i32
    return %arg0, %c0_i32 : i32, i32
  }
}

</mosaic_0001>

<llo_original>
// kernel: tpu_custom_call.1
$region0: #{tpu_custom_call.1}
  #allocation0 [shape = 'u32[]', space=smem, size = 0x4, offset = 0x4, fixed_abs, tag = 'smem constant byte address 0x4 - core index']
  #allocation1 [shape = 'u32[72,128]{1,0:T(1,128)}', space=vmem, size = 0x9000, scoped, tag = 'internal scratch']
  %s0 = inlined_call_operand.hbm [shape: bf16[256,128], index: 0, kind: input, shape index: {}]
  %s1 = inlined_call_operand.hbm [shape: bf16[128,128], index: 1, kind: input, shape index: {}]
  %s2 = inlined_call_operand.vmem [shape: f32[1,128], index: 2, kind: input, shape index: {}]
  %s3 = inlined_call_operand.hbm [shape: bf16[256,128], index: 3, kind: output, shape index: {}]
  %s4 = sld [smem:[#allocation0]]
  $region53: #{tpu_custom_call.1} parent=0
    _
  %s6 = ssub.s32 1, %s4
  %s7 = scalar_select 0, %s6, %s4
  $region1: #{tpu_custom_call.1} parent=0
    #allocation2 [shape = 'u8[65536]{0}', space=vmem, size = 0x10000, scoped, tag = 'input window, operand 0']
    #allocation3 [shape = 's32[2]{0}', space=sflag, size = 0x8, scoped, tag = 'scoped memory for tpu_custom_call.1']
    #allocation4 [shape = 's32[2]{0}', space=sflag, size = 0x8, scoped, tag = 'scoped memory for tpu_custom_call.1']
    #allocation5 [shape = 'u8[32768]{0}', space=vmem, size = 0x8000, scoped, tag = 'input window, operand 1, single buffered']
    #allocation6 [shape = 's32[1]{0}', space=sflag, size = 0x4, scoped, tag = 'scoped memory for tpu_custom_call.1']
    #allocation7 [shape = 'u8[65536]{0}', space=vmem, size = 0x10000, scoped, tag = 'output window, operand 0']
    %8 = vsyncpa [#allocation3], 0
    %s9 = scalar_lea.sflag [#allocation3], 1
    %10 = vsyncpa %s9, 0
    %11 = vsyncpa [#allocation6], 0
    %12 = vsyncpa [#allocation4], 0
    %s13 = scalar_lea.sflag [#allocation4], 1
    %14 = vsyncpa %s13, 0
    loop: start=0, step=1, limit=4
    $region2: #{tpu_custom_call.1} parent=1 // loop_pre_header
      _
    $region3: #{tpu_custom_call.1} parent=1 // loop_header
      %s16 = sphi 0, %s20
      %p17 = scmp.ge.s32.totalorder %s16, 4
      %s26 = sphi 0, %s28
      %s29 = sphi 0, %s26
      %s30 = sphi 0, %s29
      %s46 = sphi 0, %s30
      %s50 = sphi 0, %s50
      %s52 = sphi 0, %s50
      %s53 = sphi 0, %s52
      %s67 = sphi 0, %s53
      %s71 = sphi 0, %s71
      %s73 = sphi 0, %s71
      %s74 = sphi 0, %s73
      %s88 = sphi 0, %s74
      %s94 = sphi 0, %s96
      %s97 = sphi 0, %s94
      %s98 = sphi 0, %s97
      %s114 = sphi 0, %s98
    $region4: #{tpu_custom_call.1} parent=1 // loop_header_branch
      %19 = sbr.rel (%p17) target = $region8
    $region5: #{tpu_custom_call.1} parent=1 // loop_body
      %s21 = ssub.s32 %s16, 1
      %s22 = ssub.s32 %s16, 2
      %s23 = sadd.s32 %s16, 1
      %s24 = ssub.s32 %s16, %s23
      %p25 = scmp.eq.s32.totalorder %s24, 0
      %s27 = sadd.s32 %s26, 1
      %s28 = scalar_select %p25, %s26, %s27
      %p31 = pneg %p25
      %p32 = scmp.eq.s32.totalorder %s16, 1
      %p33 = por %p31, %p32
      %p34 = scmp.ne.s32.totalorder %s26, %s29
      %p35 = scmp.eq.s32.totalorder %s16, 0
      %p36 = por %p34, %p35
      %p37 = scmp.ne.s32.totalorder %s26, %s29
      %p38 = scmp.eq.s32.totalorder %s21, 1
      %p39 = por %p37, %p38
      %p40 = scmp.ne.s32.totalorder %s29, %s30
      %p41 = scmp.eq.s32.totalorder %s21, 0
      %p42 = por %p40, %p41
      %p43 = scmp.ne.s32.totalorder %s29, %s30
      %p44 = scmp.eq.s32.totalorder %s22, 1
      %p45 = por %p43, %p44
      %p47 = scmp.ne.s32.totalorder %s30, %s46
      %p48 = scmp.eq.s32.totalorder %s22, 0
      %p49 = por %p47, %p48
      %s51 = sadd.s32 %s50, 1
      %p54 = scmp.eq.s32.totalorder %s16, 1
      %p55 = scmp.ne.s32.totalorder %s50, %s52
      %p56 = scmp.eq.s32.totalorder %s16, 0
      %p57 = por %p55, %p56
      %p58 = scmp.ne.s32.totalorder %s50, %s52
      %p59 = scmp.eq.s32.totalorder %s21, 1
      %p60 = por %p58, %p59
      %p61 = scmp.ne.s32.totalorder %s52, %s53
      %p62 = scmp.eq.s32.totalorder %s21, 0
      %p63 = por %p61, %p62
      %p64 = scmp.ne.s32.totalorder %s52, %s53
      %p65 = scmp.eq.s32.totalorder %s22, 1
      %p66 = por %p64, %p65
      %p68 = scmp.ne.s32.totalorder %s53, %s67
      %p69 = scmp.eq.s32.totalorder %s22, 0
      %p70 = por %p68, %p69
      %s72 = sadd.s32 %s71, 1
      %p75 = scmp.eq.s32.totalorder %s16, 1
      %p76 = scmp.ne.s32.totalorder %s71, %s73
      %p77 = scmp.eq.s32.totalorder %s16, 0
      %p78 = por %p76, %p77
      %p79 = scmp.ne.s32.totalorder %s71, %s73
      %p80 = scmp.eq.s32.totalorder %s21, 1
      %p81 = por %p79, %p80
      %p82 = scmp.ne.s32.totalorder %s73, %s74
      %p83 = scmp.eq.s32.totalorder %s21, 0
      %p84 = por %p82, %p83
      %p85 = scmp.ne.s32.totalorder %s73, %s74
      %p86 = scmp.eq.s32.totalorder %s22, 1
      %p87 = por %p85, %p86
      %p89 = scmp.ne.s32.totalorder %s74, %s88
      %p90 = scmp.eq.s32.totalorder %s22, 0
      %p91 = por %p89, %p90
      %s92 = ssub.s32 %s16, %s23
      %p93 = scmp.eq.s32.totalorder %s92, 0
      %s95 = sadd.s32 %s94, 1
      %s96 = scalar_select %p93, %s94, %s95
      %p99 = pneg %p93
      %p100 = scmp.eq.s32.totalorder %s16, 1
      %p101 = por %p99, %p100
      %p102 = scmp.ne.s32.totalorder %s94, %s97
      %p103 = scmp.eq.s32.totalorder %s16, 0
      %p104 = por %p102, %p103
      %p105 = scmp.ne.s32.totalorder %s94, %s97
      %p106 = scmp.eq.s32.totalorder %s21, 1
      %p107 = por %p105, %p106
      %p108 = scmp.ne.s32.totalorder %s97, %s98
      %p109 = scmp.eq.s32.totalorder %s21, 0
      %p110 = por %p108, %p109
      %p111 = scmp.ne.s32.totalorder %s97, %s98
      %p112 = scmp.eq.s32.totalorder %s22, 1
      %p113 = por %p111, %p112
      %p115 = scmp.ne.s32.totalorder %s98, %s114
      %p116 = scmp.eq.s32.totalorder %s22, 0
      %p117 = por %p115, %p116
      %p118 = scmp.le.s32.totalorder 1, %s16
      %p119 = scmp.lt.s32.totalorder %s16, 3
      %p120 = pnand %p118, %p119
      %p121 = pneg %p120
      // Predicated region
      $region9: #{tpu_custom_call.1} parent=5 // pred_check
        _
      $region10: #{tpu_custom_call.1} parent=5 // pred_check_branch
        %123 = sbr.rel (%p120) target = $region12
      $region11: #{tpu_custom_call.1} parent=5 // pred_region
        %s124 = ssub.s32 %s16, 1
        // Predicated region
        $region13: #{tpu_custom_call.1} parent=11 // pred_check
          %p125 = pneg %p63
        $region14: #{tpu_custom_call.1} parent=11 // pred_check_branch
          %127 = sbr.rel (%p125) target = $region16
        $region15: #{tpu_custom_call.1} parent=11 // pred_region
          %129 = vsyncadd [#allocation6], 0
          %s130 = sshll.u32 %s1, 4
          %s131 = int_to_ptr.hbm [resolvable:$true] %s130
          %s132 = sshll.u32 [#allocation5], 4
          %s133 = int_to_ptr.vmem [resolvable:$true] %s132
          %138 = dma.hbm_to_vmem [thread:$0]  %s131, 1024, %s133, [#allocation6], 64, 64, 4
        $region16: #{tpu_custom_call.1} parent=11 // pred_fallthru
          _
        // Predicated region
        $region17: #{tpu_custom_call.1} parent=11 // pred_check
          %p139 = pneg %p84
        $region18: #{tpu_custom_call.1} parent=11 // pred_check_branch
          %141 = sbr.rel (%p139) target = $region20
        $region19: #{tpu_custom_call.1} parent=11 // pred_region
          _
        $region20: #{tpu_custom_call.1} parent=11 // pred_fallthru
          _
      $region12: #{tpu_custom_call.1} parent=5 // pred_fallthru
        _
      %p142 = scmp.lt.s32.totalorder %s16, 2
      // Predicated region
      $region21: #{tpu_custom_call.1} parent=5 // pred_check
        %p143 = pneg %p142
      $region22: #{tpu_custom_call.1} parent=5 // pred_check_branch
        %145 = sbr.rel (%p143) target = $region24
      $region23: #{tpu_custom_call.1} parent=5 // pred_region
        // Predicated region
        $region25: #{tpu_custom_call.1} parent=23 // pred_check
          %p146 = pneg %p36
        $region26: #{tpu_custom_call.1} parent=23 // pred_check_branch
          %148 = sbr.rel (%p146) target = $region28
        $region27: #{tpu_custom_call.1} parent=23 // pred_region
          %s149 = sand.u32 %s26, 1
          %s150 = scalar_lea.sflag [#allocation3], %s149
          %s151 = sand.u32 %s26, 1
          %s152 = smul.addr %s151, 64
          %s153 = scalar_lea.vmem [#allocation2], %s152
          %s154 = smul.u32 16, %s16
          %156 = vsyncadd %s150, 0
          %s157 = smul.addr %s154, 4
          %s158 = scalar_lea.hbm %s0, %s157
          %s159 = sshll.u32 %s158, 4
          %s160 = int_to_ptr.hbm [resolvable:$true] %s159
          %s161 = sshll.u32 %s153, 4
          %s162 = int_to_ptr.vmem [resolvable:$true] %s161
          %167 = dma.hbm_to_vmem [thread:$0]  %s160, 1024, %s162, %s150, 64, 64, 4
        $region28: #{tpu_custom_call.1} parent=23 // pred_fallthru
          _
      $region24: #{tpu_custom_call.1} parent=5 // pred_fallthru
        _
      %p168 = scmp.le.s32.totalorder 1, %s16
      %p169 = scmp.lt.s32.totalorder %s16, 3
      %p170 = pnand %p168, %p169
      %p171 = pneg %p170
      // Predicated region
      $region29: #{tpu_custom_call.1} parent=5 // pred_check
        _
      $region30: #{tpu_custom_call.1} parent=5 // pred_check_branch
        %173 = sbr.rel (%p170) target = $region32
      $region31: #{tpu_custom_call.1} parent=5 // pred_region
        %s174 = ssub.s32 %s16, 1
        %s175 = sand.u32 %s29, 1
        %s176 = scalar_lea.sflag [#allocation3], %s175
        %s177 = sand.u32 %s29, 1
        %s178 = smul.addr %s177, 64
        %s179 = scalar_lea.vmem [#allocation2], %s178
        // Predicated region
        $region33: #{tpu_custom_call.1} parent=31 // pred_check
          %p180 = pneg %p42
        $region34: #{tpu_custom_call.1} parent=31 // pred_check_branch
          %182 = sbr.rel (%p180) target = $region36
        $region35: #{tpu_custom_call.1} parent=31 // pred_region
          %184 = dma.done %s176, 1024
        $region36: #{tpu_custom_call.1} parent=31 // pred_fallthru
          _
        // Predicated region
        $region37: #{tpu_custom_call.1} parent=31 // pred_check
          %p185 = pneg %p63
        $region38: #{tpu_custom_call.1} parent=31 // pred_check_branch
          %187 = sbr.rel (%p185) target = $region40
        $region39: #{tpu_custom_call.1} parent=31 // pred_region
          %189 = dma.done [#allocation6], 1024
        $region40: #{tpu_custom_call.1} parent=31 // pred_fallthru
          _
        %s190 = sand.u32 %s29, 1
        %s191 = scalar_lea.sflag [#allocation3], %s190
        %s192 = sand.u32 %s29, 1
        %s193 = smul.addr %s192, 64
        %s194 = scalar_lea.vmem [#allocation2], %s193
        %p195 = pneg %p42
        %p196 = pneg %p39
        %p197 = pneg %p63
        %p198 = pneg %p60
        %p199 = pneg %p84
        %p200 = pneg %p81
        %p201 = pneg %p110
        %p202 = pneg %p107
        %s203 = sand.u32 %s97, 1
        %s204 = scalar_lea.sflag [#allocation4], %s203
        %s205 = sand.u32 %s97, 1
        %s206 = smul.addr %s205, 64
        %s207 = scalar_lea.vmem [#allocation7], %s206
        %s208 = smul.u32 16, %s21
        %s209 = smul.u32 16, %s21
        %v210 = vld [vmem:[%s179] sm:$0xf]
        %v211 = vld [vmem:[%s179 + $0x4] sm:$0xf]
        %v212 = vld [vmem:[%s179 + $0x8] sm:$0xf]
        %v213 = vld [vmem:[%s179 + $0xc] sm:$0xf]
        %v214 = vld [vmem:[%s179 + $0x10] sm:$0xf]
        %v215 = vld [vmem:[%s179 + $0x14] sm:$0xf]
        %v216 = vld [vmem:[%s179 + $0x18] sm:$0xf]
        %v217 = vld [vmem:[%s179 + $0x1c] sm:$0xf]
        %v218 = vld [vmem:[%s179 + $0x20] sm:$0xf]
        %v219 = vld [vmem:[%s179 + $0x24] sm:$0xf]
        %v220 = vld [vmem:[%s179 + $0x28] sm:$0xf]
        %v221 = vld [vmem:[%s179 + $0x2c] sm:$0xf]
        %v222 = vld [vmem:[%s179 + $0x30] sm:$0xf]
        %v223 = vld [vmem:[%s179 + $0x34] sm:$0xf]
        %v224 = vld [vmem:[%s179 + $0x38] sm:$0xf]
        %v225 = vld [vmem:[%s179 + $0x3c] sm:$0xf]
        %v226 = vld [vmem:[#allocation5] sm:$0xf]
        %v227 = vld [vmem:[#allocation5 + $0x4] sm:$0xf]
        %v228 = vld [vmem:[#allocation5 + $0x8] sm:$0xf]
        %v229 = vld [vmem:[#allocation5 + $0xc] sm:$0xf]
        %v230 = vld [vmem:[#allocation5 + $0x10] sm:$0xf]
        %v231 = vld [vmem:[#allocation5 + $0x14] sm:$0xf]
        %v232 = vld [vmem:[#allocation5 + $0x18] sm:$0xf]
        %v233 = vld [vmem:[#allocation5 + $0x1c] sm:$0xf]
        %v234 = vld [vmem:[#allocation5 + $0x20] sm:$0xf]
        %v235 = vld [vmem:[#allocation5 + $0x24] sm:$0xf]
        %v236 = vld [vmem:[#allocation5 + $0x28] sm:$0xf]
        %v237 = vld [vmem:[#allocation5 + $0x2c] sm:$0xf]
        %v238 = vld [vmem:[#allocation5 + $0x30] sm:$0xf]
        %v239 = vld [vmem:[#allocation5 + $0x34] sm:$0xf]
        %v240 = vld [vmem:[#allocation5 + $0x38] sm:$0xf]
        %v241 = vld [vmem:[#allocation5 + $0x3c] sm:$0xf]
        %v242 = vld [vmem:[%s2] sm:$0x1]
        %v244 = vperm.slane %v242, 0
        %v262 = vunpack.c.l.b16 %v210
        %v263 = vunpack.c.l.b16 %v211
        %v264 = vunpack.c.l.b16 %v212
        %v265 = vunpack.c.l.b16 %v213
        %v266 = vunpack.c.l.b16 %v214
        %v267 = vunpack.c.l.b16 %v215
        %v268 = vunpack.c.l.b16 %v216
        %v269 = vunpack.c.l.b16 %v217
        %v270 = vunpack.c.l.b16 %v218
        %v271 = vunpack.c.l.b16 %v219
        %v272 = vunpack.c.l.b16 %v220
        %v273 = vunpack.c.l.b16 %v221
        %v274 = vunpack.c.l.b16 %v222
        %v275 = vunpack.c.l.b16 %v223
        %v276 = vunpack.c.l.b16 %v224
        %v277 = vunpack.c.l.b16 %v225
        %v278 = vpack.c.b16 %v263, %v262
        %v279 = vpack.c.b16 %v265, %v264
        %v280 = vpack.c.b16 %v267, %v266
        %v281 = vpack.c.b16 %v269, %v268
        %v282 = vpack.c.b16 %v271, %v270
        %v283 = vpack.c.b16 %v273, %v272
        %v284 = vpack.c.b16 %v275, %v274
        %v285 = vpack.c.b16 %v277, %v276
        %v310 = vunpack.c.l.b16 %v226
        %v311 = vunpack.c.l.b16 %v227
        %v312 = vunpack.c.l.b16 %v228
        %v313 = vunpack.c.l.b16 %v229
        %v314 = vunpack.c.l.b16 %v230
        %v315 = vunpack.c.l.b16 %v231
        %v316 = vunpack.c.l.b16 %v232
        %v317 = vunpack.c.l.b16 %v233
        %v318 = vunpack.c.l.b16 %v234
        %v319 = vunpack.c.l.b16 %v235
        %v320 = vunpack.c.l.b16 %v236
        %v321 = vunpack.c.l.b16 %v237
        %v322 = vunpack.c.l.b16 %v238
        %v323 = vunpack.c.l.b16 %v239
        %v324 = vunpack.c.l.b16 %v240
        %v325 = vunpack.c.l.b16 %v241
        %v326 = vpack.c.b16 %v311, %v310
        %v327 = vpack.c.b16 %v313, %v312
        %v328 = vpack.c.b16 %v315, %v314
        %v329 = vpack.c.b16 %v317, %v316
        %v330 = vpack.c.b16 %v319, %v318
        %v331 = vpack.c.b16 %v321, %v320
        %v332 = vpack.c.b16 %v323, %v322
        %v333 = vpack.c.b16 %v325, %v324
        %342 = vmatpush.bf16.msra.mxu0 %v333
        %343 = vmatpush.bf16.msra.mxu0 %v332
        %344 = vmatpush.bf16.msra.mxu0 %v331
        %345 = vmatpush.bf16.msra.mxu0 %v330
        %346 = vmatpush.bf16.msra.mxu0 %v329
        %347 = vmatpush.bf16.msra.mxu0 %v328
        %348 = vmatpush.bf16.msra.mxu0 %v327
        %349 = vmatpush.bf16.msra.mxu0 %v326
        %350 = vmatmul.bf16.gmra.mxu0 %v278
        %v351 = vpop.f32.mrf.mxu0
        %v352 = vadd.f32 %v244, %v351
        %v353 = vpop.f32.mrf.mxu0
        %v354 = vadd.f32 %v244, %v353
        %355 = vmatmul.bf16.gmra.mxu0 %v279
        %v356 = vpop.f32.mrf.mxu0
        %v357 = vadd.f32 %v244, %v356
        %v358 = vpop.f32.mrf.mxu0
        %v359 = vadd.f32 %v244, %v358
        %360 = vmatmul.bf16.gmra.mxu0 %v280
        %v361 = vpop.f32.mrf.mxu0
        %v362 = vadd.f32 %v244, %v361
        %v363 = vpop.f32.mrf.mxu0
        %v364 = vadd.f32 %v244, %v363
        %365 = vmatmul.bf16.gmra.mxu0 %v281
        %v366 = vpop.f32.mrf.mxu0
        %v367 = vadd.f32 %v244, %v366
        %v368 = vpop.f32.mrf.mxu0
        %v369 = vadd.f32 %v244, %v368
        %370 = vmatmul.bf16.gmra.mxu0 %v282
        %v371 = vpop.f32.mrf.mxu0
        %v372 = vadd.f32 %v244, %v371
        %v373 = vpop.f32.mrf.mxu0
        %v374 = vadd.f32 %v244, %v373
        %375 = vmatmul.bf16.gmra.mxu0 %v283
        %v376 = vpop.f32.mrf.mxu0
        %v377 = vadd.f32 %v244, %v376
        %v378 = vpop.f32.mrf.mxu0
        %v379 = vadd.f32 %v244, %v378
        %380 = vmatmul.bf16.gmra.mxu0 %v284
        %v381 = vpop.f32.mrf.mxu0
        %v382 = vadd.f32 %v244, %v381
        %v383 = vpop.f32.mrf.mxu0
        %v384 = vadd.f32 %v244, %v383
        %385 = vmatmul.bf16.gmra.mxu0 %v285
        %v386 = vpop.f32.mrf.mxu0
        %v387 = vadd.f32 %v244, %v386
        %v388 = vpop.f32.mrf.mxu0
        %v389 = vadd.f32 %v244, %v388
        %390 = vdwg.mxu0
        %v391 = vmax.f32 %v352, 0.0
        %v392 = vmax.f32 %v354, 0.0
        %v393 = vmax.f32 %v357, 0.0
        %v394 = vmax.f32 %v359, 0.0
        %v395 = vmax.f32 %v362, 0.0
        %v396 = vmax.f32 %v364, 0.0
        %v397 = vmax.f32 %v367, 0.0
        %v398 = vmax.f32 %v369, 0.0
        %v399 = vmax.f32 %v372, 0.0
        %v400 = vmax.f32 %v374, 0.0
        %v401 = vmax.f32 %v377, 0.0
        %v402 = vmax.f32 %v379, 0.0
        %v403 = vmax.f32 %v382, 0.0
        %v404 = vmax.f32 %v384, 0.0
        %v405 = vmax.f32 %v387, 0.0
        %v406 = vmax.f32 %v389, 0.0
        %v407 = vpack.c.bf16 %v391, %v391
        %v408 = vpack.c.bf16 %v392, %v392
        %v409 = vpack.c.bf16 %v393, %v393
        %v410 = vpack.c.bf16 %v394, %v394
        %v411 = vpack.c.bf16 %v395, %v395
        %v412 = vpack.c.bf16 %v396, %v396
        %v413 = vpack.c.bf16 %v397, %v397
        %v414 = vpack.c.bf16 %v398, %v398
        %v415 = vpack.c.bf16 %v399, %v399
        %v416 = vpack.c.bf16 %v400, %v400
        %v417 = vpack.c.bf16 %v401, %v401
        %v418 = vpack.c.bf16 %v402, %v402
        %v419 = vpack.c.bf16 %v403, %v403
        %v420 = vpack.c.bf16 %v404, %v404
        %v421 = vpack.c.bf16 %v405, %v405
        %v422 = vpack.c.bf16 %v406, %v406
        %423 = vst [vmem:[%s207] sm:$0xf] %v407
        %424 = vst [vmem:[%s207 + $0x4] sm:$0xf] %v408
        %425 = vst [vmem:[%s207 + $0x8] sm:$0xf] %v409
        %426 = vst [vmem:[%s207 + $0xc] sm:$0xf] %v410
        %427 = vst [vmem:[%s207 + $0x10] sm:$0xf] %v411
        %428 = vst [vmem:[%s207 + $0x14] sm:$0xf] %v412
        %429 = vst [vmem:[%s207 + $0x18] sm:$0xf] %v413
        %430 = vst [vmem:[%s207 + $0x1c] sm:$0xf] %v414
        %431 = vst [vmem:[%s207 + $0x20] sm:$0xf] %v415
        %432 = vst [vmem:[%s207 + $0x24] sm:$0xf] %v416
        %433 = vst [vmem:[%s207 + $0x28] sm:$0xf] %v417
        %434 = vst [vmem:[%s207 + $0x2c] sm:$0xf] %v418
        %435 = vst [vmem:[%s207 + $0x30] sm:$0xf] %v419
        %436 = vst [vmem:[%s207 + $0x34] sm:$0xf] %v420
        %437 = vst [vmem:[%s207 + $0x38] sm:$0xf] %v421
        %438 = vst [vmem:[%s207 + $0x3c] sm:$0xf] %v422
        %s439 = sand.u32 %s97, 1
        %s440 = scalar_lea.sflag [#allocation4], %s439
        %s441 = sand.u32 %s97, 1
        %s442 = smul.addr %s441, 64
        %s443 = scalar_lea.vmem [#allocation7], %s442
        // Predicated region
        $region41: #{tpu_custom_call.1} parent=31 // pred_check
          %p444 = pneg %p107
        $region42: #{tpu_custom_call.1} parent=31 // pred_check_branch
          %446 = sbr.rel (%p444) target = $region44
        $region43: #{tpu_custom_call.1} parent=31 // pred_region
          %s447 = smul.u32 16, %s21
          %449 = vsyncadd %s440, 0
          %s450 = smul.addr %s447, 4
          %s451 = scalar_lea.hbm %s3, %s450
          %s452 = sshll.u32 %s443, 4
          %s453 = int_to_ptr.vmem [resolvable:$true] %s452
          %s454 = sshll.u32 %s451, 4
          %s455 = int_to_ptr.hbm [resolvable:$true] %s454
          %460 = dma.vmem_to_hbm [thread:$0]  %s453, 1024, %s455, %s440, 64, 64, 4
        $region44: #{tpu_custom_call.1} parent=31 // pred_fallthru
          _
      $region32: #{tpu_custom_call.1} parent=5 // pred_fallthru
        _
      %p461 = scmp.le.s32.totalorder 2, %s16
      // Predicated region
      $region45: #{tpu_custom_call.1} parent=5 // pred_check
        %p462 = pneg %p461
      $region46: #{tpu_custom_call.1} parent=5 // pred_check_branch
        %464 = sbr.rel (%p462) target = $region48
      $region47: #{tpu_custom_call.1} parent=5 // pred_region
        %s465 = ssub.s32 %s16, 2
        // Predicated region
        $region49: #{tpu_custom_call.1} parent=47 // pred_check
          %p466 = pneg %p113
        $region50: #{tpu_custom_call.1} parent=47 // pred_check_branch
          %468 = sbr.rel (%p466) target = $region52
        $region51: #{tpu_custom_call.1} parent=47 // pred_region
          %s469 = sand.u32 %s98, 1
          %s470 = scalar_lea.sflag [#allocation4], %s469
          %s471 = sand.u32 %s98, 1
          %s472 = smul.addr %s471, 64
          %s473 = scalar_lea.vmem [#allocation7], %s472
          %475 = dma.done %s470, 1024
        $region52: #{tpu_custom_call.1} parent=47 // pred_fallthru
          _
      $region48: #{tpu_custom_call.1} parent=5 // pred_fallthru
        _
    $region6: #{tpu_custom_call.1} parent=1 // loop_footer
      %s20 = sadd.s32 1, %s16
    $region7: #{tpu_custom_call.1} parent=1 // loop_footer_branch
      %15 = sbr.rel target = $region3
    $region8: #{tpu_custom_call.1} parent=1 // loop_exit
      _
    %476 = vsyncpa [#allocation3], 1
    %s477 = scalar_lea.sflag [#allocation3], 1
    %478 = vsyncpa %s477, 1
    %479 = vsyncpa [#allocation6], 1
    %480 = vsyncpa [#allocation4], 1
    %s481 = scalar_lea.sflag [#allocation4], 1
    %482 = vsyncpa %s481, 1

</llo_original>
